<compile_context>
chip_gen: v7x
topology: tpu7x:2x2x1
jax: 0.10.0
libtpu: 0.0.40
codegen_flags: <defaults>
</compile_context>

<pallas_src>
import jax
import jax.numpy as jnp
from jax import lax
from jax.experimental import pallas as pl
from jax.experimental.pallas import tpu as pltpu


def _round_up(n, m):
    return ((n + m - 1) // m) * m


def _pick_tile_b(B, H, itemsize, *, requested=None, vmem_budget_bytes=8 << 20):
    """Pick a batch tile: multiple of 8, capped by VMEM budget and 2048 rows."""
    if requested is None:
        # Two x buffers (double buffering) of [tb, H] should fit in the budget.
        requested = vmem_budget_bytes // max(1, 2 * H * itemsize)
    tb = max(8, min(2048, requested))
    tb = min(tb, _round_up(B, 8))
    return _round_up(tb, 8)


def _itm_head_kernel(x_ref, w_ref, b_ref, o_ref):
    # x_ref: [TILE_B, H], w_ref: [OUT, H] (PyTorch layout), b_ref: [1, OUT]
    # Contract H (last dim of both) on the MXU with f32 accumulation: x @ W.T
    acc = lax.dot_general(
        x_ref[...],
        w_ref[...],
        dimension_numbers=(((1,), (1,)), ((), ())),
        preferred_element_type=jnp.float32,
    )
    o_ref[...] = (acc + b_ref[...].astype(jnp.float32)).astype(o_ref.dtype)


def itm_head(x, weight, bias, *, tile_b=None):
    """x: [..., H]; weight: [out, H] (PyTorch Linear layout); bias: [out]."""
    *lead, H = x.shape
    out_dim = weight.shape[0]

    # nn.Linear applies to the last dim; flatten any leading dims.
    x2d = x.reshape(-1, H)
    B = x2d.shape[0]

    itemsize = jnp.dtype(x.dtype).itemsize
    tb = _pick_tile_b(B, H, itemsize, requested=tile_b)

    Bp = _round_up(B, tb)
    if Bp != B:
        x2d = jnp.pad(x2d, ((0, Bp - B), (0, 0)))

    b2d = bias.reshape(1, out_dim)

    out = pl.pallas_call(
        _itm_head_kernel,
        out_shape=jax.ShapeDtypeStruct((Bp, out_dim), x.dtype),
        grid_spec=pl.GridSpec(
            grid=(Bp // tb,),
            in_specs=[
                # x: streamed per batch tile (double-buffered by Pallas).
                pl.BlockSpec((tb, H), lambda i: (i, 0)),
                # weight / bias: constant index_map -> resident across the grid.
                pl.BlockSpec((out_dim, H), lambda i: (0, 0)),
                pl.BlockSpec((1, out_dim), lambda i: (0, 0)),
            ],
            out_specs=pl.BlockSpec((tb, out_dim), lambda i: (i, 0)),
        ),
        compiler_params=pltpu.CompilerParams(
            dimension_semantics=("parallel",),
        ),
        cost_estimate=pl.CostEstimate(
            flops=2 * Bp * H * out_dim,
            transcendentals=0,
            bytes_accessed=(Bp * H + out_dim * H + out_dim + Bp * out_dim)
            * itemsize,
        ),
    )(x2d, weight, b2d)

    if Bp != B:
        out = out[:B]
    return out.reshape(*lead, out_dim)


if __name__ == "__main__":
    hidden_size = 32

    key = jax.random.PRNGKey(0)
    kx, kw, kb, kx2, kx3 = jax.random.split(key, 5)

    # Deterministic synthetic parameters (PyTorch Linear shapes: W [2, H], b [2]).
    bound = 1.0 / (hidden_size ** 0.5)
    weight = jax.random.uniform(kw, (2, hidden_size), jnp.float32, -bound, bound)
    bias = jax.random.uniform(kb, (2,), jnp.float32, -bound, bound)

    # Case 1: batch multiple of 8.
    x = jax.random.normal(kx, (8, hidden_size), jnp.float32)
    out = jax.block_until_ready(itm_head(x, weight, bias))
    ref = x @ weight.T + bias
    assert out.shape == (8, 2)
    assert jnp.allclose(out, ref, atol=1e-5, rtol=1e-5)

    # Case 2: ragged batch (exercises the wrapper padding path).
    x2 = jax.random.normal(kx2, (10, hidden_size), jnp.float32)
    out2 = jax.block_until_ready(itm_head(x2, weight, bias))
    ref2 = x2 @ weight.T + bias
    assert out2.shape == (10, 2)
    assert jnp.allclose(out2, ref2, atol=1e-5, rtol=1e-5)

    # Case 3: leading dims (e.g. [batch, seq, H]) like nn.Linear.
    x3 = jax.random.normal(kx3, (2, 8, hidden_size), jnp.float32)
    out3 = jax.block_until_ready(itm_head(x3, weight, bias))
    ref3 = x3 @ weight.T + bias
    assert out3.shape == (2, 8, 2)
    assert jnp.allclose(out3, ref3, atol=1e-5, rtol=1e-5)

    print("KERNEL_OK")
</pallas_src>

<mosaic_0001>
module attributes {stable_mosaic.version = 11 : i64} {
  func.func @_itm_head_kernel(%arg0: i32, %arg1: memref<8x32xf32, #tpu.memory_space<vmem>>, %arg2: memref<2x32xf32, #tpu.memory_space<vmem>>, %arg3: memref<1x2xf32, #tpu.memory_space<vmem>>, %arg4: memref<8x2xf32, #tpu.memory_space<vmem>>) attributes {dimension_semantics = [#tpu.dimension_semantics<parallel>], iteration_bounds = array<i64: 1>, scalar_prefetch = 0 : i64, scratch_operands = 0 : i64, tpu.core_type = #tpu.core_type<tc>, window_params = [{transform_indices = @transform_0, window_bounds = array<i64: 8, 32>}, {pipeline_mode = #tpu.pipeline_mode<synchronous>, transform_indices = @transform_1, window_bounds = array<i64: 2, 32>}, {pipeline_mode = #tpu.pipeline_mode<synchronous>, transform_indices = @transform_2, window_bounds = array<i64: 1, 2>}, {transform_indices = @transform_3, window_bounds = array<i64: 8, 2>}]} {
    %c0 = arith.constant 0 : index
    %c0_0 = arith.constant 0 : index
    %0 = vector.load %arg1[%c0, %c0_0] : memref<8x32xf32, #tpu.memory_space<vmem>>, vector<8x32xf32>
    %c0_1 = arith.constant 0 : index
    %c0_2 = arith.constant 0 : index
    %1 = vector.load %arg2[%c0_1, %c0_2] : memref<2x32xf32, #tpu.memory_space<vmem>>, vector<2x32xf32>
    %cst = arith.constant dense<0.000000e+00> : vector<8x2xf32>
    %2 = tpu.matmul %0, %1, %cst {dimension_numbers = #tpu.dot_dimension_numbers<[1], [1], [0], [0], [0, 0, 1, 0], [], []>} : vector<8x32xf32>, vector<2x32xf32>, vector<8x2xf32> -> vector<8x2xf32>
    %c0_3 = arith.constant 0 : index
    %c0_4 = arith.constant 0 : index
    %3 = vector.load %arg3[%c0_3, %c0_4] : memref<1x2xf32, #tpu.memory_space<vmem>>, vector<1x2xf32>
    %4 = vector.broadcast %3 : vector<1x2xf32> to vector<8x2xf32>
    %5 = arith.addf %2, %4 : vector<8x2xf32>
    %c0_5 = arith.constant 0 : index
    %c0_6 = arith.constant 0 : index
    %6 = vector.load %arg4[%c0_5, %c0_6] : memref<8x2xf32, #tpu.memory_space<vmem>>, vector<8x2xf32>
    tpu.vector_store %arg4[%c0_5, %c0_6], %5 {strides = array<i32>} : memref<8x2xf32, #tpu.memory_space<vmem>>, vector<8x2xf32>,
    return
  }
  func.func @transform_0(%arg0: i32) -> (i32, i32) {
    %c0_i32 = arith.constant 0 : i32
    %c0_i32_0 = arith.constant 0 : i32
    return %arg0, %c0_i32 : i32, i32
  }
  func.func @transform_1(%arg0: i32) -> (i32, i32) {
    %c0_i32 = arith.constant 0 : i32
    %c0_i32_0 = arith.constant 0 : i32
    %c0_i32_1 = arith.constant 0 : i32
    return %c0_i32, %c0_i32_0 : i32, i32
  }
  func.func @transform_2(%arg0: i32) -> (i32, i32) {
    %c0_i32 = arith.constant 0 : i32
    %c0_i32_0 = arith.constant 0 : i32
    %c0_i32_1 = arith.constant 0 : i32
    return %c0_i32, %c0_i32_0 : i32, i32
  }
  func.func @transform_3(%arg0: i32) -> (i32, i32) {
    %c0_i32 = arith.constant 0 : i32
    %c0_i32_0 = arith.constant 0 : i32
    return %arg0, %c0_i32 : i32, i32
  }
}

</mosaic_0001>

<llo_original>
// kernel: tpu_custom_call.1
$region0: #{tpu_custom_call.1}
  #allocation0 [shape = 'u32[]', space=smem, size = 0x4, offset = 0x4, fixed_abs, tag = 'smem constant byte address 0x4 - core index']
  #allocation1 [shape = 'u32[144,128]{1,0:T(1,128)}', space=vmem, size = 0x12000, scoped, tag = 'internal scratch']
  %s0 = inlined_call_operand.hbm [shape: f32[8,32], index: 0, kind: input, shape index: {}]
  %s1 = inlined_call_operand.vmem [shape: f32[2,32], index: 1, kind: input, shape index: {}]
  %s2 = inlined_call_operand.vmem [shape: f32[1,2], index: 2, kind: input, shape index: {}]
  %s3 = inlined_call_operand.vmem [shape: f32[8,2], index: 3, kind: output, shape index: {}]
  %s4 = sld [smem:[#allocation0]]
  $region26: #{tpu_custom_call.1} parent=0
    _
  %s6 = ssub.s32 1, %s4
  %s7 = scalar_select 0, %s6, %s4
  $region1: #{tpu_custom_call.1} parent=0
    #allocation2 [shape = 'u8[4096]{0}', space=vmem, size = 0x1000, scoped, tag = 'input window, operand 0, single buffered']
    #allocation3 [shape = 's32[1]{0}', space=sflag, size = 0x4, scoped, tag = 'scoped memory for tpu_custom_call.1']
    %8 = vsyncpa [#allocation3], 0
    // Predicated region
    $region2: #{tpu_custom_call.1} parent=1 // pred_check
      _
    $region3: #{tpu_custom_call.1} parent=1 // pred_check_branch
      %10 = sbr.rel (0) target = $region5
    $region4: #{tpu_custom_call.1} parent=1 // pred_region
      %s12 = ssub.s32 128, 128
      %13 = vsyncadd [#allocation3], %s12
      %s15 = sshll.u32 [#allocation2], 4
      %s16 = int_to_ptr.vmem [resolvable:$true] %s15
      %18 = dma.hbm_to_vmem [thread:$0]  %s0, 128, %s16, [#allocation3]
    $region5: #{tpu_custom_call.1} parent=1 // pred_fallthru
      _
    // Predicated region
    $region6: #{tpu_custom_call.1} parent=1 // pred_check
      _
    $region7: #{tpu_custom_call.1} parent=1 // pred_check_branch
      %20 = sbr.rel (0) target = $region9
    $region8: #{tpu_custom_call.1} parent=1 // pred_region
      _
    $region9: #{tpu_custom_call.1} parent=1 // pred_fallthru
      _
    // Predicated region
    $region10: #{tpu_custom_call.1} parent=1 // pred_check
      _
    $region11: #{tpu_custom_call.1} parent=1 // pred_check_branch
      %22 = sbr.rel (0) target = $region13
    $region12: #{tpu_custom_call.1} parent=1 // pred_region
      _
    $region13: #{tpu_custom_call.1} parent=1 // pred_fallthru
      _
    // Predicated region
    $region14: #{tpu_custom_call.1} parent=1 // pred_check
      _
    $region15: #{tpu_custom_call.1} parent=1 // pred_check_branch
      %24 = sbr.rel (0) target = $region17
    $region16: #{tpu_custom_call.1} parent=1 // pred_region
      %25 = dma.done [#allocation3], 128
    $region17: #{tpu_custom_call.1} parent=1 // pred_fallthru
      _
    %v26 = vld [vmem:[#allocation2] sm:$0xff]
    %v27 = vld [vmem:[%s1] sm:$0x3]
    %v28 = vld [vmem:[%s2] sm:$0x1]
    %v30 = vlaneseq
    %v31 = vshrl.u32 %v30, 7
    %v32 = vsub.s32 0, %v31
    %v33 = vrot.slane %v28, %v32
    %vm35 = vcmask 261120
    %v37 = vsel %vm35, %v26, 0
    %v40 = vsel %vm35, %v27, 0
    %42 = vmatprep.subr.mxu0 0.0
    %43 = vmatpush1.xpose.msra.mxu0 %v40
    %44 = vmatprep.subr.mxu0 0.0
    %45 = vmatpush1.xpose.msra.mxu0 0.0
    %46 = vmatprep.subr.mxu0 0.0
    %47 = vmatpush1.xpose.msra.mxu0 0.0
    %48 = vmatprep.subr.mxu0 0.0
    %49 = vmatpush1.xpose.msra.mxu0 0.0
    %50 = vmatprep.subr.mxu0 0.0
    %51 = vmatpush1.xpose.msra.mxu0 0.0
    %52 = vmatprep.subr.mxu0 0.0
    %53 = vmatpush1.xpose.msra.mxu0 0.0
    %54 = vmatprep.subr.mxu0 0.0
    %55 = vmatpush1.xpose.msra.mxu0 0.0
    %56 = vmatprep.subr.mxu0 0.0
    %57 = vmatpush1.xpose.msra.mxu0 0.0
    %58 = vmatprep.subr.mxu0 0.0
    %59 = vmatpush1.xpose.msra.mxu0 0.0
    %60 = vmatprep.subr.mxu0 0.0
    %61 = vmatpush1.xpose.msra.mxu0 0.0
    %62 = vmatprep.subr.mxu0 0.0
    %63 = vmatpush1.xpose.msra.mxu0 0.0
    %64 = vmatprep.subr.mxu0 0.0
    %65 = vmatpush1.xpose.msra.mxu0 0.0
    %66 = vmatprep.subr.mxu0 0.0
    %67 = vmatpush1.xpose.msra.mxu0 0.0
    %68 = vmatprep.subr.mxu0 0.0
    %69 = vmatpush1.xpose.msra.mxu0 0.0
    %70 = vmatprep.subr.mxu0 0.0
    %71 = vmatpush1.xpose.msra.mxu0 0.0
    %72 = vmatprep.subr.mxu0 0.0
    %73 = vmatpush1.xpose.msra.mxu0 0.0
    %74 = vmatprep.subr.mxu0 0.0
    %75 = vmatpush1.xpose.msra.mxu0 0.0
    %76 = vmatprep.subr.mxu0 0.0
    %77 = vmatpush1.xpose.msra.mxu0 0.0
    %78 = vmatprep.subr.mxu0 0.0
    %79 = vmatpush1.xpose.msra.mxu0 0.0
    %80 = vmatprep.subr.mxu0 0.0
    %81 = vmatpush1.xpose.msra.mxu0 0.0
    %82 = vmatprep.subr.mxu0 0.0
    %83 = vmatpush1.xpose.msra.mxu0 0.0
    %84 = vmatprep.subr.mxu0 0.0
    %85 = vmatpush1.xpose.msra.mxu0 0.0
    %86 = vmatprep.subr.mxu0 0.0
    %87 = vmatpush1.xpose.msra.mxu0 0.0
    %88 = vmatprep.subr.mxu0 0.0
    %89 = vmatpush1.xpose.msra.mxu0 0.0
    %90 = vmatprep.subr.mxu0 0.0
    %91 = vmatpush1.xpose.msra.mxu0 0.0
    %92 = vmatprep.subr.mxu0 0.0
    %93 = vmatpush1.xpose.msra.mxu0 0.0
    %94 = vmatprep.subr.mxu0 0.0
    %95 = vmatpush1.xpose.msra.mxu0 0.0
    %96 = vmatprep.subr.mxu0 0.0
    %97 = vmatpush1.xpose.msra.mxu0 0.0
    %98 = vmatprep.subr.mxu0 0.0
    %99 = vmatpush1.xpose.msra.mxu0 0.0
    %100 = vmatprep.subr.mxu0 0.0
    %101 = vmatpush1.xpose.msra.mxu0 0.0
    %102 = vmatprep.subr.mxu0 0.0
    %103 = vmatpush1.xpose.msra.mxu0 0.0
    %104 = vmatprep.subr.mxu0 0.0
    %105 = vmatpush1.xpose.msra.mxu0 0.0
    %106 = vmatprep.mubr.f32.mxu0 0.0
    %107 = vmatmul.mubr.f32.gmra.mrb[0].mxu0 %v37
    %v108 = vpop.f32.mrb[0].mxu0
    %v109 = vadd.f32 %v33, %v108
    %v110 = vpop.f32.mrb[0].mxu0
    %111 = vdwg.mxu0
    %vm112 = vcmask 15360
    %113 = vst.msk [vmem:[%s3] sm:$0xff] %vm112, %v109
    // Predicated region
    $region18: #{tpu_custom_call.1} parent=1 // pred_check
      _
    $region19: #{tpu_custom_call.1} parent=1 // pred_check_branch
      %115 = sbr.rel (0) target = $region21
    $region20: #{tpu_custom_call.1} parent=1 // pred_region
      _
    $region21: #{tpu_custom_call.1} parent=1 // pred_fallthru
      _
    // Predicated region
    $region22: #{tpu_custom_call.1} parent=1 // pred_check
      _
    $region23: #{tpu_custom_call.1} parent=1 // pred_check_branch
      %117 = sbr.rel (0) target = $region25
    $region24: #{tpu_custom_call.1} parent=1 // pred_region
      _
    $region25: #{tpu_custom_call.1} parent=1 // pred_fallthru
      _
    %118 = vsyncpa [#allocation3], 1

</llo_original>
